<compile_context>
chip_gen: v7x
topology: tpu7x:2x2x1
jax: 0.10.0
libtpu: 0.0.40
codegen_flags: <defaults>
</compile_context>

<pallas_src>
import math

import jax
import jax.numpy as jnp
from jax.experimental import pallas as pl
from jax.experimental.pallas import tpu as pltpu

_LANE = 128
_SUBLANE = 8
_MAX_TILE_F = 2048            # lane-dense feature tile (multiple of 128)
_TARGET_BLOCK_BYTES = 1 << 20  # ~1 MiB per x block


def _round_up(n, m):
    return ((n + m - 1) // m) * m


def _dropout_path_kernel(x_ref, mask_ref, o_ref):
    # mask_ref is (TILE_B, 1): per-sample 0.0 or 1/keep_prob, broadcast over
    # the lane (feature) axis.  Pure elementwise multiply in native dtype.
    o_ref[...] = x_ref[...] * mask_ref[...]


def dropout_path(x, seed, *, drop_prob=0.0, training=False, scale_by_keep=True):
    """Pallas TPU implementation of DropoutPath.forward (stochastic depth)."""
    if drop_prob == 0.0 or not training:
        return x
    keep_prob = 1.0 - drop_prob

    B = x.shape[0]
    F = int(math.prod(x.shape[1:]))

    # ---- per-sample mask (hoisted out of the kernel) ----------------------
    key = jax.random.PRNGKey(seed)
    keep = jax.random.bernoulli(key, p=keep_prob, shape=(B,))
    scale = (1.0 / keep_prob) if (scale_by_keep and keep_prob > 0.0) else 1.0
    mask = jnp.where(keep, jnp.asarray(scale, x.dtype), jnp.asarray(0.0, x.dtype))
    mask = mask.reshape(B, 1)

    # ---- lane-dense 2-D view + tiling --------------------------------------
    itemsize = jnp.dtype(x.dtype).itemsize
    tile_f = min(_round_up(F, _LANE), _MAX_TILE_F)
    f_pad = _round_up(F, tile_f)

    rows_for_target = max(1, _TARGET_BLOCK_BYTES // (tile_f * itemsize))
    tile_b = max(_SUBLANE,
                 min(_round_up(B, _SUBLANE), _round_up(rows_for_target, _SUBLANE)))
    tile_b = min(tile_b, 512)
    b_pad = _round_up(B, tile_b)

    x2 = x.reshape(B, F)
    if (b_pad, f_pad) != (B, F):
        x2 = jnp.pad(x2, ((0, b_pad - B), (0, f_pad - F)))
    if b_pad != B:
        mask = jnp.pad(mask, ((0, b_pad - B), (0, 0)))

    grid = (b_pad // tile_b, f_pad // tile_f)

    out = pl.pallas_call(
        _dropout_path_kernel,
        out_shape=jax.ShapeDtypeStruct((b_pad, f_pad), x.dtype),
        grid=grid,
        in_specs=[
            pl.BlockSpec((tile_b, tile_f), lambda i, j: (i, j)),
            pl.BlockSpec((tile_b, 1), lambda i, j: (i, 0)),
        ],
        out_specs=pl.BlockSpec((tile_b, tile_f), lambda i, j: (i, j)),
        compiler_params=pltpu.CompilerParams(
            dimension_semantics=("parallel", "parallel"),
        ),
    )(x2, mask)

    return out[:B, :F].reshape(x.shape)


if __name__ == "__main__":
    key = jax.random.PRNGKey(0)
    x = jax.random.normal(key, (2, 4, 16, 16), dtype=jnp.float32)

    drop_prob = 0.3
    keep_prob = 1.0 - drop_prob

    # Training path: per-sample stochastic depth via the Pallas kernel.
    y = dropout_path(x, seed=1234, drop_prob=drop_prob, training=True,
                     scale_by_keep=True)
    y = jax.block_until_ready(y)
    assert y.shape == x.shape and y.dtype == x.dtype

    # Each sample must be either entirely zero or exactly x / keep_prob.
    for b in range(x.shape[0]):
        yb = y[b]
        zeroed = bool(jnp.all(yb == 0.0))
        scaled = bool(jnp.allclose(yb, x[b] / keep_prob, rtol=1e-5, atol=1e-5))
        assert zeroed or scaled, f"sample {b}: not a valid drop-path output"

    # Non-128-aligned feature size exercises the padding path.
    x2 = jax.random.normal(jax.random.PRNGKey(1), (3, 5, 7, 9), dtype=jnp.float32)
    y2 = jax.block_until_ready(
        dropout_path(x2, seed=7, drop_prob=drop_prob, training=True,
                     scale_by_keep=True))
    assert y2.shape == x2.shape
    for b in range(x2.shape[0]):
        yb = y2[b]
        zeroed = bool(jnp.all(yb == 0.0))
        scaled = bool(jnp.allclose(yb, x2[b] / keep_prob, rtol=1e-5, atol=1e-5))
        assert zeroed or scaled, f"sample {b}: bad drop-path output (padded case)"

    # scale_by_keep=False: surviving samples equal x exactly.
    y3 = jax.block_until_ready(
        dropout_path(x, seed=42, drop_prob=drop_prob, training=True,
                     scale_by_keep=False))
    for b in range(x.shape[0]):
        yb = y3[b]
        assert bool(jnp.all(yb == 0.0)) or bool(
            jnp.allclose(yb, x[b], rtol=1e-6, atol=1e-6))

    # Eval / drop_prob=0 paths: identity.
    y_eval = jax.block_until_ready(
        dropout_path(x, seed=1234, drop_prob=drop_prob, training=False))
    assert bool(jnp.all(y_eval == x))
    assert dropout_path(x, seed=1, drop_prob=0.0, training=True) is x

    print("KERNEL_OK")
</pallas_src>

<mosaic_0001>
module attributes {stable_mosaic.version = 11 : i64} {
  func.func @_dropout_path_kernel(%arg0: i32, %arg1: i32, %arg2: memref<8x1024xf32, #tpu.memory_space<vmem>>, %arg3: memref<8x1xf32, #tpu.memory_space<vmem>>, %arg4: memref<8x1024xf32, #tpu.memory_space<vmem>>) attributes {dimension_semantics = [#tpu.dimension_semantics<parallel>, #tpu.dimension_semantics<parallel>], iteration_bounds = array<i64: 1, 1>, scalar_prefetch = 0 : i64, scratch_operands = 0 : i64, tpu.core_type = #tpu.core_type<tc>, window_params = [{transform_indices = @transform_0, window_bounds = array<i64: 8, 1024>}, {transform_indices = @transform_1, window_bounds = array<i64: 8, 1>}, {transform_indices = @transform_2, window_bounds = array<i64: 8, 1024>}]} {
    %c0 = arith.constant 0 : index
    %c0_0 = arith.constant 0 : index
    %0 = vector.load %arg2[%c0, %c0_0] : memref<8x1024xf32, #tpu.memory_space<vmem>>, vector<8x1024xf32>
    %c0_1 = arith.constant 0 : index
    %c0_2 = arith.constant 0 : index
    %1 = vector.load %arg3[%c0_1, %c0_2] : memref<8x1xf32, #tpu.memory_space<vmem>>, vector<8x1xf32>
    %2 = vector.broadcast %1 : vector<8x1xf32> to vector<8x1024xf32>
    %3 = arith.mulf %0, %2 : vector<8x1024xf32>
    %c0_3 = arith.constant 0 : index
    %c0_4 = arith.constant 0 : index
    %4 = vector.load %arg4[%c0_3, %c0_4] : memref<8x1024xf32, #tpu.memory_space<vmem>>, vector<8x1024xf32>
    tpu.vector_store %arg4[%c0_3, %c0_4], %3 {strides = array<i32>} : memref<8x1024xf32, #tpu.memory_space<vmem>>, vector<8x1024xf32>,
    return
  }
  func.func @transform_0(%arg0: i32, %arg1: i32) -> (i32, i32) {
    %c0_i32 = arith.constant 0 : i32
    return %arg0, %arg1 : i32, i32
  }
  func.func @transform_1(%arg0: i32, %arg1: i32) -> (i32, i32) {
    %c0_i32 = arith.constant 0 : i32
    %c0_i32_0 = arith.constant 0 : i32
    return %arg0, %c0_i32 : i32, i32
  }
  func.func @transform_2(%arg0: i32, %arg1: i32) -> (i32, i32) {
    %c0_i32 = arith.constant 0 : i32
    return %arg0, %arg1 : i32, i32
  }
}

</mosaic_0001>

<llo_original>
// kernel: tpu_custom_call.1
$region0: #{tpu_custom_call.1}
  #allocation0 [shape = 'u32[]', space=smem, size = 0x4, offset = 0x4, fixed_abs, tag = 'smem constant byte address 0x4 - core index']
  #allocation1 [shape = 'u32[144,128]{1,0:T(1,128)}', space=vmem, size = 0x12000, scoped, tag = 'internal scratch']
  %s0 = inlined_call_operand.hbm [shape: f32[8,1024], index: 0, kind: input, shape index: {}]
  %s1 = inlined_call_operand.vmem [shape: f32[8,1], index: 1, kind: input, shape index: {}]
  %s2 = inlined_call_operand.hbm [shape: f32[8,1024], index: 2, kind: output, shape index: {}]
  %s3 = sld [smem:[#allocation0]]
  $region22: #{tpu_custom_call.1} parent=0
    _
  %s5 = ssub.s32 1, %s3
  %s6 = scalar_select 0, %s5, %s3
  $region1: #{tpu_custom_call.1} parent=0
    #allocation2 [shape = 'u8[32768]{0}', space=vmem, size = 0x8000, scoped, tag = 'input window, operand 0, single buffered']
    #allocation3 [shape = 's32[1]{0}', space=sflag, size = 0x4, scoped, tag = 'scoped memory for tpu_custom_call.1']
    #allocation4 [shape = 's32[1]{0}', space=sflag, size = 0x4, scoped, tag = 'scoped memory for tpu_custom_call.1']
    #allocation5 [shape = 'u8[32768]{0}', space=vmem, size = 0x8000, scoped, tag = 'output window, operand 0, single buffered']
    %7 = vsyncpa [#allocation3], 0
    %8 = vsyncpa [#allocation4], 0
    // Predicated region
    $region2: #{tpu_custom_call.1} parent=1 // pred_check
      _
    $region3: #{tpu_custom_call.1} parent=1 // pred_check_branch
      %10 = sbr.rel (0) target = $region5
    $region4: #{tpu_custom_call.1} parent=1 // pred_region
      %s12 = ssub.s32 1024, 1024
      %13 = vsyncadd [#allocation3], %s12
      %s15 = sshll.u32 [#allocation2], 4
      %s16 = int_to_ptr.vmem [resolvable:$true] %s15
      %18 = dma.hbm_to_vmem [thread:$0]  %s0, 1024, %s16, [#allocation3]
    $region5: #{tpu_custom_call.1} parent=1 // pred_fallthru
      _
    // Predicated region
    $region6: #{tpu_custom_call.1} parent=1 // pred_check
      _
    $region7: #{tpu_custom_call.1} parent=1 // pred_check_branch
      %20 = sbr.rel (0) target = $region9
    $region8: #{tpu_custom_call.1} parent=1 // pred_region
      _
    $region9: #{tpu_custom_call.1} parent=1 // pred_fallthru
      _
    // Predicated region
    $region10: #{tpu_custom_call.1} parent=1 // pred_check
      _
    $region11: #{tpu_custom_call.1} parent=1 // pred_check_branch
      %22 = sbr.rel (0) target = $region13
    $region12: #{tpu_custom_call.1} parent=1 // pred_region
      %23 = dma.done [#allocation3], 1024
    $region13: #{tpu_custom_call.1} parent=1 // pred_fallthru
      _
    %v24 = vld [vmem:[#allocation2] sm:$0xff]
    %v25 = vld [vmem:[#allocation2 + $0x8] sm:$0xff]
    %v26 = vld [vmem:[#allocation2 + $0x10] sm:$0xff]
    %v27 = vld [vmem:[#allocation2 + $0x18] sm:$0xff]
    %v28 = vld [vmem:[#allocation2 + $0x20] sm:$0xff]
    %v29 = vld [vmem:[#allocation2 + $0x28] sm:$0xff]
    %v30 = vld [vmem:[#allocation2 + $0x30] sm:$0xff]
    %v31 = vld [vmem:[#allocation2 + $0x38] sm:$0xff]
    %v32 = vld [vmem:[%s1] sm:$0xff]
    %34 = vset.pattern.permute.xlu0 0
    %35 = vperm.xlu0 %34, %v32
    %v36 = vpop.permute.xlu0 %35
    %v38 = vmul.f32 %v24, %v36
    %v39 = vmul.f32 %v25, %v36
    %v40 = vmul.f32 %v26, %v36
    %v41 = vmul.f32 %v27, %v36
    %v42 = vmul.f32 %v28, %v36
    %v43 = vmul.f32 %v29, %v36
    %v44 = vmul.f32 %v30, %v36
    %v45 = vmul.f32 %v31, %v36
    %46 = vst [vmem:[#allocation5] sm:$0xff] %v38
    %47 = vst [vmem:[#allocation5 + $0x8] sm:$0xff] %v39
    %48 = vst [vmem:[#allocation5 + $0x10] sm:$0xff] %v40
    %49 = vst [vmem:[#allocation5 + $0x18] sm:$0xff] %v41
    %50 = vst [vmem:[#allocation5 + $0x20] sm:$0xff] %v42
    %51 = vst [vmem:[#allocation5 + $0x28] sm:$0xff] %v43
    %52 = vst [vmem:[#allocation5 + $0x30] sm:$0xff] %v44
    %53 = vst [vmem:[#allocation5 + $0x38] sm:$0xff] %v45
    // Predicated region
    $region14: #{tpu_custom_call.1} parent=1 // pred_check
      _
    $region15: #{tpu_custom_call.1} parent=1 // pred_check_branch
      %55 = sbr.rel (0) target = $region17
    $region16: #{tpu_custom_call.1} parent=1 // pred_region
      %s57 = ssub.s32 1024, 1024
      %58 = vsyncadd [#allocation4], %s57
      %s60 = sshll.u32 [#allocation5], 4
      %s61 = int_to_ptr.vmem [resolvable:$true] %s60
      %63 = dma.vmem_to_hbm [thread:$0]  %s61, 1024, %s2, [#allocation4]
    $region17: #{tpu_custom_call.1} parent=1 // pred_fallthru
      _
    // Predicated region
    $region18: #{tpu_custom_call.1} parent=1 // pred_check
      _
    $region19: #{tpu_custom_call.1} parent=1 // pred_check_branch
      %65 = sbr.rel (0) target = $region21
    $region20: #{tpu_custom_call.1} parent=1 // pred_region
      %66 = dma.done [#allocation4], 1024
    $region21: #{tpu_custom_call.1} parent=1 // pred_fallthru
      _
    %67 = vsyncpa [#allocation3], 1
    %68 = vsyncpa [#allocation4], 1

</llo_original>
